<compile_context>
chip_gen: v6e
topology: v6e:2x2x1
jax: 0.10.0
libtpu: 0.0.40
codegen_flags: <defaults>
</compile_context>

<pallas_src>
import functools
import math

import jax
import jax.numpy as jnp
from jax import lax
from jax.experimental import pallas as pl
from jax.experimental.pallas import tpu as pltpu

_INV_SQRT2 = 1.0 / math.sqrt(2.0)
_SQRT_2_OVER_PI = math.sqrt(2.0 / math.pi)


def _gelu_exact(x):
    # exact (erf-based) GELU -- used only by the pure-JAX reference.
    return 0.5 * x * (1.0 + lax.erf(x * _INV_SQRT2))


def _gelu_tanh(x):
    # tanh-approx GELU: tanh goes to the EUP (its own VLIW slot), leaving only
    # a handful of VALU ops on the binding vector-ALU slot.
    return 0.5 * x * (1.0 + jnp.tanh(_SQRT_2_OVER_PI * (x + 0.044715 * x * x * x)))


# --------------------------------------------------------------------------
# Pallas kernel: whole shuffle_block2 forward for TN batch images per step.
# Working layout: (BT, HW) with BT = TN*C -- rows = (image, channel),
# lanes = flattened spatial.
# --------------------------------------------------------------------------
def _shuffle_block2_kernel(x_ref, w12_ref, w3s_ref, b3f_ref, pm_ref, o_ref,
                           *, W, sb):
    hw = x_ref.shape[1]
    bt = x_ref.shape[0]
    x = x_ref[...]                                            # (BT, HW) f32

    # conv1 + conv2 (spatial-as-channel 1x1 convs): one bf16 MXU matmul,
    # f32 accumulation.  Biases are folded downstream into b3f.
    s = jnp.dot(x.astype(jnp.bfloat16), w12_ref[...],
                preferred_element_type=jnp.float32)           # (BT, HW) f32

    # conv3 (1x1 over the real channel axis; channels live on rows): block-
    # diagonal matmul applied per SB-row sub-block so the kron(I, w3) waste
    # does not grow quadratically with the batch tile.
    s16 = s.astype(jnp.bfloat16)
    w3s = w3s_ref[...]                                        # (SB, SB) bf16
    pieces = [
        jnp.dot(w3s, s16[g * sb:(g + 1) * sb, :],
                preferred_element_type=jnp.float32)
        for g in range(bt // sb)
    ]
    t = pieces[0] if len(pieces) == 1 else jnp.concatenate(pieces, axis=0)

    # fused bias (b3 + w3-propagated b1/b2), then tanh-approx GELU (f32).
    t = _gelu_tanh(t + b3f_ref[...])

    # conv4: 3x3 depthwise (groups=C) with bn3 folded in.  pm[k] (k<9) is the
    # bn-scaled tap already multiplied by the zero-padding edge mask; pm[9] is
    # the folded bn shift.  Shortcut (exact f32 x) added before the final GELU.
    acc = x + pm_ref[9]
    k = 0
    for di in (-1, 0, 1):
        for dj in (-1, 0, 1):
            off = di * W + dj
            shifted = t if off == 0 else pltpu.roll(t, (-off) % hw, axis=1)
            acc = acc + pm_ref[k] * shifted                   # single FMA/tap
            k += 1

    o_ref[...] = _gelu_tanh(acc)                              # lane-dense store


# --------------------------------------------------------------------------
# Tiling policy
# --------------------------------------------------------------------------
def _pick_tn(N, C, target_bt=512):
    """Largest batch tile with TN | N, BT = TN*C sublane-aligned, BT <= 512.

    512 rows fills the MXU M dimension (2x the 256-row LHS tile on v6e/v7x,
    4x the 128-row tile on v5e) and amortizes the ~0.35us per-grid-step
    pipeline overhead, while keeping per-step VMEM small.
    """
    cands = [tn for tn in range(1, N + 1)
             if N % tn == 0 and (tn * C) % 8 == 0 and tn * C <= target_bt]
    if not cands:
        # No sublane-aligned divisor: block equals the full row extent (legal,
        # padded sublane layout).  TODO(synk): explicit row padding would give
        # an aligned layout here.
        return N
    tn = max(cands)
    # Keep >=2 grid steps (both v7x TensorCores busy) when a half-size tile is
    # still big enough (>=256 rows) to keep the MXU well fed.
    if N // tn == 1:
        smaller = [t for t in cands if N // t >= 2 and t * C >= 256]
        if smaller:
            tn = max(smaller)
    return tn


def _pick_sb(TN, C, limit=128):
    """conv3 sub-block rows: largest multiple of C dividing TN*C, <= ~128."""
    k_best = 1
    for k in range(1, TN + 1):
        if TN % k == 0 and k * C <= limit:
            k_best = k
    return k_best * C


# --------------------------------------------------------------------------
# One-time weight preparation (pure algebra on parameters, no per-input work)
# --------------------------------------------------------------------------
def pack_params(p, C, H, W, TN, SB, eps=1e-5):
    HW = H * W
    BT = TN * C
    f32 = jnp.float32
    w1 = p['w1'].astype(f32)
    w2 = p['w2'].astype(f32)
    w3 = p['w3'].astype(f32)

    # conv1: out1[b, i*W+j] = sum_h x[b, i*W+h] * w1[j, h]   -> kron(I_H, w1.T)
    # conv2: out2[b, i*W+j] = sum_p w2[i, p] * x[b, p*W+j]   -> kron(w2.T, I_W)
    w12 = (jnp.kron(jnp.eye(H, dtype=f32), w1.T) +
           jnp.kron(w2.T, jnp.eye(W, dtype=f32)))             # (HW, HW)
    w12 = w12.astype(jnp.bfloat16)                            # bf16 MXU operand

    # conv3 over channels, block-diagonal over the SB//C images of a sub-block.
    w3sub = jnp.kron(jnp.eye(SB // C, dtype=f32), w3).astype(jnp.bfloat16)

    # conv1/conv2 biases B[i,j] = b1[j] + b2[i], pushed through the linear
    # conv3:  w3 @ (s + B) + b3 = w3 @ s + (w3.sum(1) * B + b3).
    b12 = (p['b2'][:, None] + p['b1'][None, :]).reshape(1, HW)
    b3f = w3.sum(axis=1)[:, None] * b12 + p['b3'][:, None]    # (C, HW)
    b3f = jnp.tile(b3f.astype(f32), (TN, 1))                  # (BT, HW) f32

    # bn3 (inference mode) folded into the depthwise taps and shift.
    bn_a = p['gamma'] / jnp.sqrt(p['run_var'] + eps)
    bn_b = p['beta'] - p['run_mean'] * bn_a
    taps = jnp.tile(bn_a[:, None] * p['w4'].reshape(C, 9), (TN, 1))   # (BT, 9)
    shift = jnp.tile((bn_a * p['b4'] + bn_b)[:, None], (TN, 1))       # (BT, 1)

    # Pre-multiply each tap with its zero-padding edge mask on the flattened
    # spatial axis (same (di, dj) order as the kernel loop) -> one FMA per tap
    # in the kernel, no mask mul / column broadcasts.
    m = jnp.arange(HW)
    row, col = m // W, m % W
    slabs = []
    k = 0
    for di in (-1, 0, 1):
        for dj in (-1, 0, 1):
            ok = ((row + di >= 0) & (row + di < H) &
                  (col + dj >= 0) & (col + dj < W)).astype(f32)       # (HW,)
            slabs.append(taps[:, k:k + 1] * ok[None, :])              # (BT, HW)
            k += 1
    slabs.append(jnp.broadcast_to(shift, (BT, HW)))                   # bn shift
    pm = jnp.stack(slabs).astype(f32)                                 # (10, BT, HW)

    return w12, w3sub, b3f, pm


# --------------------------------------------------------------------------
# Wrapper
# --------------------------------------------------------------------------
def shuffle_block2_forward(x, params, eps=1e-5):
    N, C, H, W = x.shape
    assert H == W, "shuffle_block2 requires H == W (out + out2 shapes)"
    assert params['w1'].shape == (W, W) and params['w2'].shape == (W, W), \
        "conv1/conv2 channel count must equal the spatial size"
    assert params['w3'].shape == (C, C), "conv3/bn3 channel count must equal C"

    HW = H * W
    TN = _pick_tn(N, C)
    BT = TN * C
    SB = _pick_sb(TN, C)
    packed = pack_params(params, C, H, W, TN, SB, eps)
    xf = x.reshape(N * C, HW).astype(jnp.float32)             # free reshape

    kernel = functools.partial(_shuffle_block2_kernel, W=W, sb=SB)
    grid_spec = pltpu.PrefetchScalarGridSpec(
        num_scalar_prefetch=0,
        grid=(N // TN,),
        in_specs=[
            pl.BlockSpec((BT, HW), lambda n: (n, 0)),        # x rows of tile
            pl.BlockSpec((HW, HW), lambda n: (0, 0)),        # fused conv1/2 (bf16)
            pl.BlockSpec((SB, SB), lambda n: (0, 0)),        # conv3 sub-block (bf16)
            pl.BlockSpec((BT, HW), lambda n: (0, 0)),        # fused conv3 bias
            pl.BlockSpec((10, BT, HW), lambda n: (0, 0, 0)), # premult taps + shift
        ],
        out_specs=pl.BlockSpec((BT, HW), lambda n: (n, 0)),
    )
    out = pl.pallas_call(
        kernel,
        out_shape=jax.ShapeDtypeStruct((N * C, HW), jnp.float32),
        grid_spec=grid_spec,
        compiler_params=pltpu.CompilerParams(
            dimension_semantics=("parallel",),               # batch tiles independent
            vmem_limit_bytes=32 * 1024 * 1024,
        ),
    )(xf, *packed)
    return out.reshape(N, C, H, W)


# --------------------------------------------------------------------------
# Deterministic parameter init (PyTorch-like shapes / scales)
# --------------------------------------------------------------------------
def init_params(key, in_ch1, out_ch1, bn_ch):
    assert in_ch1 == out_ch1, "needed for `out + out2` shapes to match"
    ks = jax.random.split(key, 10)

    def u(k, shape, fan_in):
        bound = 1.0 / math.sqrt(fan_in)
        return jax.random.uniform(k, shape, jnp.float32, -bound, bound)

    return dict(
        w1=u(ks[0], (out_ch1, in_ch1), in_ch1),      # conv1.weight[:, :, 0, 0]
        b1=u(ks[1], (out_ch1,), in_ch1),
        w2=u(ks[2], (out_ch1, in_ch1), in_ch1),      # conv2.weight[:, :, 0, 0]
        b2=u(ks[3], (out_ch1,), in_ch1),
        w3=u(ks[4], (bn_ch, bn_ch), bn_ch),          # conv3.weight[:, :, 0, 0]
        b3=u(ks[5], (bn_ch,), bn_ch),
        w4=u(ks[6], (bn_ch, 1, 3, 3), 9),            # conv4 depthwise weight
        b4=u(ks[7], (bn_ch,), 9),
        gamma=1.0 + u(ks[8], (bn_ch,), 4.0),         # bn3 weight
        beta=u(ks[9], (bn_ch,), 4.0),                # bn3 bias
        run_mean=jnp.zeros((bn_ch,), jnp.float32),
        run_var=jnp.ones((bn_ch,), jnp.float32),
    )


# --------------------------------------------------------------------------
# Pure-JAX reference mirroring the PyTorch forward (sanity check, exact GELU)
# --------------------------------------------------------------------------
def reference_forward(x, p, eps=1e-5):
    def conv1x1(z, w, b):
        return jnp.einsum('oc,nchw->nohw', w, z) + b[None, :, None, None]

    out = jnp.transpose(x, (0, 3, 1, 2))             # NCWH -> NHCW
    out = conv1x1(out, p['w1'], p['b1'])
    out = jnp.transpose(out, (0, 2, 3, 1))           # NHCW -> NCWH
    out2 = jnp.transpose(x, (0, 2, 3, 1))            # NCWH -> NWHC
    out2 = conv1x1(out2, p['w2'], p['b2'])
    out2 = jnp.transpose(out2, (0, 3, 1, 2))         # NWHC -> NCWH
    out = out + out2
    out = _gelu_exact(conv1x1(out, p['w3'], p['b3']))
    C = x.shape[1]
    dw = lax.conv_general_dilated(out, p['w4'], (1, 1), ((1, 1), (1, 1)),
                                  dimension_numbers=('NCHW', 'OIHW', 'NCHW'),
                                  feature_group_count=C)
    dw = dw + p['b4'][None, :, None, None]
    bn_a = p['gamma'] / jnp.sqrt(p['run_var'] + eps)
    bn_b = p['beta'] - p['run_mean'] * bn_a
    bn = dw * bn_a[None, :, None, None] + bn_b[None, :, None, None]
    return _gelu_exact(bn + x)


if __name__ == "__main__":
    N, bn_ch, spatial = 2, 4, 16
    in_ch1 = out_ch1 = spatial                       # required by the forward's shapes

    key = jax.random.PRNGKey(0)
    kx, kp = jax.random.split(key)
    x = jax.random.normal(kx, (N, bn_ch, spatial, spatial), jnp.float32)
    params = init_params(kp, in_ch1, out_ch1, bn_ch)

    y = shuffle_block2_forward(x, params)
    y = jax.block_until_ready(y)

    y_ref = reference_forward(x, params)
    err = float(jnp.max(jnp.abs(y - y_ref)))
    assert jnp.allclose(y, y_ref, atol=2e-2, rtol=2e-2), f"max abs err {err}"
    print("KERNEL_OK")
</pallas_src>

<mosaic_0001>
module attributes {stable_mosaic.version = 11 : i64} {
  func.func @_shuffle_block2_kernel(%arg0: i32, %arg1: memref<8x256xf32, #tpu.memory_space<vmem>>, %arg2: memref<256x256xbf16, #tpu.memory_space<vmem>>, %arg3: memref<8x8xbf16, #tpu.memory_space<vmem>>, %arg4: memref<8x256xf32, #tpu.memory_space<vmem>>, %arg5: memref<10x8x256xf32, #tpu.memory_space<vmem>>, %arg6: memref<8x256xf32, #tpu.memory_space<vmem>>) attributes {dimension_semantics = [#tpu.dimension_semantics<parallel>], iteration_bounds = array<i64: 1>, scalar_prefetch = 0 : i64, scratch_operands = 0 : i64, tpu.core_type = #tpu.core_type<tc>, window_params = [{transform_indices = @transform_0, window_bounds = array<i64: 8, 256>}, {pipeline_mode = #tpu.pipeline_mode<synchronous>, transform_indices = @transform_1, window_bounds = array<i64: 256, 256>}, {pipeline_mode = #tpu.pipeline_mode<synchronous>, transform_indices = @transform_2, window_bounds = array<i64: 8, 8>}, {pipeline_mode = #tpu.pipeline_mode<synchronous>, transform_indices = @transform_3, window_bounds = array<i64: 8, 256>}, {pipeline_mode = #tpu.pipeline_mode<synchronous>, transform_indices = @transform_4, window_bounds = array<i64: 10, 8, 256>}, {transform_indices = @transform_5, window_bounds = array<i64: 8, 256>}]} {
    %c0 = arith.constant 0 : index
    %c0_0 = arith.constant 0 : index
    %0 = vector.load %arg1[%c0, %c0_0] : memref<8x256xf32, #tpu.memory_space<vmem>>, vector<8x256xf32>
    %1 = arith.truncf %0 : vector<8x256xf32> to vector<8x256xbf16>
    %c0_1 = arith.constant 0 : index
    %c0_2 = arith.constant 0 : index
    %2 = vector.load %arg2[%c0_1, %c0_2] : memref<256x256xbf16, #tpu.memory_space<vmem>>, vector<256x256xbf16>
    %cst = arith.constant dense<0.000000e+00> : vector<8x256xf32>
    %3 = tpu.matmul %1, %2, %cst {dimension_numbers = #tpu.dot_dimension_numbers<[1], [0], [0], [1], [0, 0, 1, 1], [], []>} : vector<8x256xbf16>, vector<256x256xbf16>, vector<8x256xf32> -> vector<8x256xf32>
    %4 = arith.truncf %3 : vector<8x256xf32> to vector<8x256xbf16>
    %c0_3 = arith.constant 0 : index
    %c0_4 = arith.constant 0 : index
    %5 = vector.load %arg3[%c0_3, %c0_4] : memref<8x8xbf16, #tpu.memory_space<vmem>>, vector<8x8xbf16>
    %cst_5 = arith.constant dense<0.000000e+00> : vector<8x256xf32>
    %6 = tpu.matmul %5, %4, %cst_5 {dimension_numbers = #tpu.dot_dimension_numbers<[1], [0], [0], [1], [0, 0, 1, 1], [], []>} : vector<8x8xbf16>, vector<8x256xbf16>, vector<8x256xf32> -> vector<8x256xf32>
    %c0_6 = arith.constant 0 : index
    %c0_7 = arith.constant 0 : index
    %7 = vector.load %arg4[%c0_6, %c0_7] : memref<8x256xf32, #tpu.memory_space<vmem>>, vector<8x256xf32>
    %8 = arith.addf %6, %7 : vector<8x256xf32>
    %cst_8 = arith.constant 5.000000e-01 : f32
    %9 = vector.broadcast %cst_8 : f32 to vector<8x256xf32>
    %10 = arith.mulf %9, %8 : vector<8x256xf32>
    %cst_9 = arith.constant 4.471500e-02 : f32
    %11 = vector.broadcast %cst_9 : f32 to vector<8x256xf32>
    %12 = arith.mulf %11, %8 : vector<8x256xf32>
    %13 = arith.mulf %12, %8 : vector<8x256xf32>
    %14 = arith.mulf %13, %8 : vector<8x256xf32>
    %15 = arith.addf %8, %14 : vector<8x256xf32>
    %cst_10 = arith.constant 0.797884583 : f32
    %16 = vector.broadcast %cst_10 : f32 to vector<8x256xf32>
    %17 = arith.mulf %16, %15 : vector<8x256xf32>
    %18 = math.tanh %17 : vector<8x256xf32>
    %cst_11 = arith.constant 1.000000e+00 : f32
    %19 = vector.broadcast %cst_11 : f32 to vector<8x256xf32>
    %20 = arith.addf %19, %18 : vector<8x256xf32>
    %21 = arith.mulf %10, %20 : vector<8x256xf32>
    %c9 = arith.constant 9 : index
    %c0_12 = arith.constant 0 : index
    %c0_13 = arith.constant 0 : index
    %22 = vector.load %arg5[%c9, %c0_12, %c0_13] : memref<10x8x256xf32, #tpu.memory_space<vmem>>, vector<1x8x256xf32>
    %23 = vector.shape_cast %22 : vector<1x8x256xf32> to vector<8x256xf32>
    %24 = arith.addf %0, %23 : vector<8x256xf32>
    %c17_i32 = arith.constant 17 : i32
    %25 = tpu.dynamic_rotate %21 by %c17_i32 dim 1 : vector<8x256xf32>, i32 -> vector<8x256xf32>
    %c0_14 = arith.constant 0 : index
    %c0_15 = arith.constant 0 : index
    %c0_16 = arith.constant 0 : index
    %26 = vector.load %arg5[%c0_14, %c0_15, %c0_16] : memref<10x8x256xf32, #tpu.memory_space<vmem>>, vector<1x8x256xf32>
    %27 = vector.shape_cast %26 : vector<1x8x256xf32> to vector<8x256xf32>
    %28 = arith.mulf %27, %25 : vector<8x256xf32>
    %29 = arith.addf %24, %28 : vector<8x256xf32>
    %c16_i32 = arith.constant 16 : i32
    %30 = tpu.dynamic_rotate %21 by %c16_i32 dim 1 : vector<8x256xf32>, i32 -> vector<8x256xf32>
    %c1 = arith.constant 1 : index
    %c0_17 = arith.constant 0 : index
    %c0_18 = arith.constant 0 : index
    %31 = vector.load %arg5[%c1, %c0_17, %c0_18] : memref<10x8x256xf32, #tpu.memory_space<vmem>>, vector<1x8x256xf32>
    %32 = vector.shape_cast %31 : vector<1x8x256xf32> to vector<8x256xf32>
    %33 = arith.mulf %32, %30 : vector<8x256xf32>
    %34 = arith.addf %29, %33 : vector<8x256xf32>
    %c15_i32 = arith.constant 15 : i32
    %35 = tpu.dynamic_rotate %21 by %c15_i32 dim 1 : vector<8x256xf32>, i32 -> vector<8x256xf32>
    %c2 = arith.constant 2 : index
    %c0_19 = arith.constant 0 : index
    %c0_20 = arith.constant 0 : index
    %36 = vector.load %arg5[%c2, %c0_19, %c0_20] : memref<10x8x256xf32, #tpu.memory_space<vmem>>, vector<1x8x256xf32>
    %37 = vector.shape_cast %36 : vector<1x8x256xf32> to vector<8x256xf32>
    %38 = arith.mulf %37, %35 : vector<8x256xf32>
    %39 = arith.addf %34, %38 : vector<8x256xf32>
    %c1_i32 = arith.constant 1 : i32
    %40 = tpu.dynamic_rotate %21 by %c1_i32 dim 1 : vector<8x256xf32>, i32 -> vector<8x256xf32>
    %c3 = arith.constant 3 : index
    %c0_21 = arith.constant 0 : index
    %c0_22 = arith.constant 0 : index
    %41 = vector.load %arg5[%c3, %c0_21, %c0_22] : memref<10x8x256xf32, #tpu.memory_space<vmem>>, vector<1x8x256xf32>
    %42 = vector.shape_cast %41 : vector<1x8x256xf32> to vector<8x256xf32>
    %43 = arith.mulf %42, %40 : vector<8x256xf32>
    %44 = arith.addf %39, %43 : vector<8x256xf32>
    %c4 = arith.constant 4 : index
    %c0_23 = arith.constant 0 : index
    %c0_24 = arith.constant 0 : index
    %45 = vector.load %arg5[%c4, %c0_23, %c0_24] : memref<10x8x256xf32, #tpu.memory_space<vmem>>, vector<1x8x256xf32>
    %46 = vector.shape_cast %45 : vector<1x8x256xf32> to vector<8x256xf32>
    %47 = arith.mulf %46, %21 : vector<8x256xf32>
    %48 = arith.addf %44, %47 : vector<8x256xf32>
    %c255_i32 = arith.constant 255 : i32
    %49 = tpu.dynamic_rotate %21 by %c255_i32 dim 1 : vector<8x256xf32>, i32 -> vector<8x256xf32>
    %c5 = arith.constant 5 : index
    %c0_25 = arith.constant 0 : index
    %c0_26 = arith.constant 0 : index
    %50 = vector.load %arg5[%c5, %c0_25, %c0_26] : memref<10x8x256xf32, #tpu.memory_space<vmem>>, vector<1x8x256xf32>
    %51 = vector.shape_cast %50 : vector<1x8x256xf32> to vector<8x256xf32>
    %52 = arith.mulf %51, %49 : vector<8x256xf32>
    %53 = arith.addf %48, %52 : vector<8x256xf32>
    %c241_i32 = arith.constant 241 : i32
    %54 = tpu.dynamic_rotate %21 by %c241_i32 dim 1 : vector<8x256xf32>, i32 -> vector<8x256xf32>
    %c6 = arith.constant 6 : index
    %c0_27 = arith.constant 0 : index
    %c0_28 = arith.constant 0 : index
    %55 = vector.load %arg5[%c6, %c0_27, %c0_28] : memref<10x8x256xf32, #tpu.memory_space<vmem>>, vector<1x8x256xf32>
    %56 = vector.shape_cast %55 : vector<1x8x256xf32> to vector<8x256xf32>
    %57 = arith.mulf %56, %54 : vector<8x256xf32>
    %58 = arith.addf %53, %57 : vector<8x256xf32>
    %c240_i32 = arith.constant 240 : i32
    %59 = tpu.dynamic_rotate %21 by %c240_i32 dim 1 : vector<8x256xf32>, i32 -> vector<8x256xf32>
    %c7 = arith.constant 7 : index
    %c0_29 = arith.constant 0 : index
    %c0_30 = arith.constant 0 : index
    %60 = vector.load %arg5[%c7, %c0_29, %c0_30] : memref<10x8x256xf32, #tpu.memory_space<vmem>>, vector<1x8x256xf32>
    %61 = vector.shape_cast %60 : vector<1x8x256xf32> to vector<8x256xf32>
    %62 = arith.mulf %61, %59 : vector<8x256xf32>
    %63 = arith.addf %58, %62 : vector<8x256xf32>
    %c239_i32 = arith.constant 239 : i32
    %64 = tpu.dynamic_rotate %21 by %c239_i32 dim 1 : vector<8x256xf32>, i32 -> vector<8x256xf32>
    %c8 = arith.constant 8 : index
    %c0_31 = arith.constant 0 : index
    %c0_32 = arith.constant 0 : index
    %65 = vector.load %arg5[%c8, %c0_31, %c0_32] : memref<10x8x256xf32, #tpu.memory_space<vmem>>, vector<1x8x256xf32>
    %66 = vector.shape_cast %65 : vector<1x8x256xf32> to vector<8x256xf32>
    %67 = arith.mulf %66, %64 : vector<8x256xf32>
    %68 = arith.addf %63, %67 : vector<8x256xf32>
    %cst_33 = arith.constant 5.000000e-01 : f32
    %69 = vector.broadcast %cst_33 : f32 to vector<8x256xf32>
    %70 = arith.mulf %69, %68 : vector<8x256xf32>
    %cst_34 = arith.constant 4.471500e-02 : f32
    %71 = vector.broadcast %cst_34 : f32 to vector<8x256xf32>
    %72 = arith.mulf %71, %68 : vector<8x256xf32>
    %73 = arith.mulf %72, %68 : vector<8x256xf32>
    %74 = arith.mulf %73, %68 : vector<8x256xf32>
    %75 = arith.addf %68, %74 : vector<8x256xf32>
    %cst_35 = arith.constant 0.797884583 : f32
    %76 = vector.broadcast %cst_35 : f32 to vector<8x256xf32>
    %77 = arith.mulf %76, %75 : vector<8x256xf32>
    %78 = math.tanh %77 : vector<8x256xf32>
    %cst_36 = arith.constant 1.000000e+00 : f32
    %79 = vector.broadcast %cst_36 : f32 to vector<8x256xf32>
    %80 = arith.addf %79, %78 : vector<8x256xf32>
    %81 = arith.mulf %70, %80 : vector<8x256xf32>
    %c0_37 = arith.constant 0 : index
    %c0_38 = arith.constant 0 : index
    %82 = vector.load %arg6[%c0_37, %c0_38] : memref<8x256xf32, #tpu.memory_space<vmem>>, vector<8x256xf32>
    tpu.vector_store %arg6[%c0_37, %c0_38], %81 {strides = array<i32>} : memref<8x256xf32, #tpu.memory_space<vmem>>, vector<8x256xf32>,
    return
  }
  func.func @transform_0(%arg0: i32) -> (i32, i32) {
    %c0_i32 = arith.constant 0 : i32
    %c0_i32_0 = arith.constant 0 : i32
    return %arg0, %c0_i32 : i32, i32
  }
  func.func @transform_1(%arg0: i32) -> (i32, i32) {
    %c0_i32 = arith.constant 0 : i32
    %c0_i32_0 = arith.constant 0 : i32
    %c0_i32_1 = arith.constant 0 : i32
    return %c0_i32, %c0_i32_0 : i32, i32
  }
  func.func @transform_2(%arg0: i32) -> (i32, i32) {
    %c0_i32 = arith.constant 0 : i32
    %c0_i32_0 = arith.constant 0 : i32
    %c0_i32_1 = arith.constant 0 : i32
    return %c0_i32, %c0_i32_0 : i32, i32
  }
  func.func @transform_3(%arg0: i32) -> (i32, i32) {
    %c0_i32 = arith.constant 0 : i32
    %c0_i32_0 = arith.constant 0 : i32
    %c0_i32_1 = arith.constant 0 : i32
    return %c0_i32, %c0_i32_0 : i32, i32
  }
  func.func @transform_4(%arg0: i32) -> (i32, i32, i32) {
    %c0_i32 = arith.constant 0 : i32
    %c0_i32_0 = arith.constant 0 : i32
    %c0_i32_1 = arith.constant 0 : i32
    %c0_i32_2 = arith.constant 0 : i32
    return %c0_i32, %c0_i32_0, %c0_i32_1 : i32, i32, i32
  }
  func.func @transform_5(%arg0: i32) -> (i32, i32) {
    %c0_i32 = arith.constant 0 : i32
    %c0_i32_0 = arith.constant 0 : i32
    return %arg0, %c0_i32 : i32, i32
  }
}

</mosaic_0001>

<llo_original>
// kernel: tpu_custom_call.1
$region0: #{tpu_custom_call.1}
  #allocation0 [shape = 'u32[]', space=smem, size = 0x4, offset = 0x4, fixed_abs, tag = 'smem constant byte address 0x4 - core index']
  #allocation1 [shape = 'u32[144,128]{1,0:T(1,128)}', space=vmem, size = 0x12000, scoped, tag = 'internal scratch']
  %s0 = inlined_call_operand.hbm [shape: f32[8,256], index: 0, kind: input, shape index: {}]
  %s1 = inlined_call_operand.hbm [shape: bf16[256,256], index: 1, kind: input, shape index: {}]
  %s2 = inlined_call_operand.hbm [shape: bf16[8,8], index: 2, kind: input, shape index: {}]
  %s3 = inlined_call_operand.hbm [shape: f32[8,256], index: 3, kind: input, shape index: {}]
  %s4 = inlined_call_operand.hbm [shape: f32[10,8,256], index: 4, kind: input, shape index: {}]
  %s5 = inlined_call_operand.hbm [shape: f32[8,256], index: 5, kind: output, shape index: {}]
  %s6 = sld [smem:[#allocation0]]
  $region50: #{tpu_custom_call.1} parent=0
    _
  %s8 = ssub.s32 1, %s6
  %s9 = scalar_select 0, %s8, %s6
  $region1: #{tpu_custom_call.1} parent=0
    #allocation2 [shape = 'u8[8192]{0}', space=vmem, size = 0x2000, scoped, tag = 'input window, operand 0, single buffered']
    #allocation3 [shape = 's32[1]{0}', space=sflag, size = 0x4, scoped, tag = 'scoped memory for tpu_custom_call.1']
    #allocation4 [shape = 's32[1]{0}', space=sflag, size = 0x4, scoped, tag = 'scoped memory for tpu_custom_call.1']
    #allocation5 [shape = 'u8[131072]{0}', space=vmem, size = 0x20000, scoped, tag = 'input window, operand 1, single buffered']
    #allocation6 [shape = 's32[1]{0}', space=sflag, size = 0x4, scoped, tag = 'scoped memory for tpu_custom_call.1']
    #allocation7 [shape = 'u8[2048]{0}', space=vmem, size = 0x800, scoped, tag = 'input window, operand 2, single buffered']
    #allocation8 [shape = 'u8[8192]{0}', space=vmem, size = 0x2000, scoped, tag = 'input window, operand 3, single buffered']
    #allocation9 [shape = 's32[1]{0}', space=sflag, size = 0x4, scoped, tag = 'scoped memory for tpu_custom_call.1']
    #allocation10 [shape = 'u8[81920]{0}', space=vmem, size = 0x14000, scoped, tag = 'input window, operand 4, single buffered']
    #allocation11 [shape = 'u8[8192]{0}', space=vmem, size = 0x2000, scoped, tag = 'output window, operand 0, single buffered']
    %10 = vsyncpa [#allocation3], 0
    %11 = vsyncpa [#allocation6], 0
    %12 = vsyncpa [#allocation9], 0
    %13 = vsyncpa [#allocation4], 0
    // Predicated region
    $region2: #{tpu_custom_call.1} parent=1 // pred_check
      _
    $region3: #{tpu_custom_call.1} parent=1 // pred_check_branch
      %15 = sbr.rel (0) target = $region5
    $region4: #{tpu_custom_call.1} parent=1 // pred_region
      %s17 = ssub.s32 256, 256
      %18 = vsyncadd [#allocation3], %s17
      %s20 = sshll.u32 [#allocation2], 4
      %s21 = int_to_ptr.vmem [resolvable:$true] %s20
      %23 = dma.hbm_to_vmem [thread:$0]  %s0, 256, %s21, [#allocation3]
    $region5: #{tpu_custom_call.1} parent=1 // pred_fallthru
      _
    // Predicated region
    $region6: #{tpu_custom_call.1} parent=1 // pred_check
      _
    $region7: #{tpu_custom_call.1} parent=1 // pred_check_branch
      %25 = sbr.rel (0) target = $region9
    $region8: #{tpu_custom_call.1} parent=1 // pred_region
      %s27 = ssub.s32 4096, 4096
      %28 = vsyncadd [#allocation6], %s27
      %s29 = sshll.u32 [#allocation5], 4
      %s30 = int_to_ptr.vmem [resolvable:$true] %s29
      %35 = dma.hbm_to_vmem [thread:$0]  %s1, 4096, %s30, [#allocation6], 128, 128, 8
    $region9: #{tpu_custom_call.1} parent=1 // pred_fallthru
      _
    // Predicated region
    $region10: #{tpu_custom_call.1} parent=1 // pred_check
      _
    $region11: #{tpu_custom_call.1} parent=1 // pred_check_branch
      %37 = sbr.rel (0) target = $region13
    $region12: #{tpu_custom_call.1} parent=1 // pred_region
      %s39 = ssub.s32 64, 64
      %40 = vsyncadd [#allocation6], %s39
      %s42 = sshll.u32 [#allocation7], 4
      %s43 = int_to_ptr.vmem [resolvable:$true] %s42
      %45 = dma.hbm_to_vmem [thread:$0]  %s2, 64, %s43, [#allocation6]
    $region13: #{tpu_custom_call.1} parent=1 // pred_fallthru
      _
    // Predicated region
    $region14: #{tpu_custom_call.1} parent=1 // pred_check
      _
    $region15: #{tpu_custom_call.1} parent=1 // pred_check_branch
      %47 = sbr.rel (0) target = $region17
    $region16: #{tpu_custom_call.1} parent=1 // pred_region
      %s49 = ssub.s32 256, 256
      %50 = vsyncadd [#allocation9], %s49
      %s52 = sshll.u32 [#allocation8], 4
      %s53 = int_to_ptr.vmem [resolvable:$true] %s52
      %55 = dma.hbm_to_vmem [thread:$0]  %s3, 256, %s53, [#allocation9]
    $region17: #{tpu_custom_call.1} parent=1 // pred_fallthru
      _
    // Predicated region
    $region18: #{tpu_custom_call.1} parent=1 // pred_check
      _
    $region19: #{tpu_custom_call.1} parent=1 // pred_check_branch
      %57 = sbr.rel (0) target = $region21
    $region20: #{tpu_custom_call.1} parent=1 // pred_region
      %s59 = ssub.s32 2560, 2560
      %60 = vsyncadd [#allocation9], %s59
      %s61 = sshll.u32 [#allocation10], 4
      %s62 = int_to_ptr.vmem [resolvable:$true] %s61
      %67 = dma.hbm_to_vmem [thread:$0]  %s4, 2560, %s62, [#allocation9], 256, 256, 16
    $region21: #{tpu_custom_call.1} parent=1 // pred_fallthru
      _
    // Predicated region
    $region22: #{tpu_custom_call.1} parent=1 // pred_check
      _
    $region23: #{tpu_custom_call.1} parent=1 // pred_check_branch
      %69 = sbr.rel (0) target = $region25
    $region24: #{tpu_custom_call.1} parent=1 // pred_region
      %70 = dma.done [#allocation3], 256
    $region25: #{tpu_custom_call.1} parent=1 // pred_fallthru
      _
    // Predicated region
    $region26: #{tpu_custom_call.1} parent=1 // pred_check
      _
    $region27: #{tpu_custom_call.1} parent=1 // pred_check_branch
      %72 = sbr.rel (0) target = $region29
    $region28: #{tpu_custom_call.1} parent=1 // pred_region
      %73 = dma.done [#allocation6], 4096
    $region29: #{tpu_custom_call.1} parent=1 // pred_fallthru
      _
    // Predicated region
    $region30: #{tpu_custom_call.1} parent=1 // pred_check
      _
    $region31: #{tpu_custom_call.1} parent=1 // pred_check_branch
      %75 = sbr.rel (0) target = $region33
    $region32: #{tpu_custom_call.1} parent=1 // pred_region
      %76 = dma.done [#allocation6], 64
    $region33: #{tpu_custom_call.1} parent=1 // pred_fallthru
      _
    // Predicated region
    $region34: #{tpu_custom_call.1} parent=1 // pred_check
      _
    $region35: #{tpu_custom_call.1} parent=1 // pred_check_branch
      %78 = sbr.rel (0) target = $region37
    $region36: #{tpu_custom_call.1} parent=1 // pred_region
      %79 = dma.done [#allocation9], 256
    $region37: #{tpu_custom_call.1} parent=1 // pred_fallthru
      _
    // Predicated region
    $region38: #{tpu_custom_call.1} parent=1 // pred_check
      _
    $region39: #{tpu_custom_call.1} parent=1 // pred_check_branch
      %81 = sbr.rel (0) target = $region41
    $region40: #{tpu_custom_call.1} parent=1 // pred_region
      %82 = dma.done [#allocation9], 2560
    $region41: #{tpu_custom_call.1} parent=1 // pred_fallthru
      _
    %v84 = vld [vmem:[#allocation2] sm:$0xff]
    %v85 = vld [vmem:[#allocation2 + $0x8] sm:$0xff]
    %v86 = vpack.c.bf16 %v84, %v84
    %v87 = vpack.c.bf16 %v85, %v85
    %v88 = vld [vmem:[#allocation5] sm:$0xff]
    %v89 = vld [vmem:[#allocation5 + $0x8] sm:$0xff]
    %v90 = vld [vmem:[#allocation5 + $0x10] sm:$0xff]
    %v91 = vld [vmem:[#allocation5 + $0x18] sm:$0xff]
    %v92 = vld [vmem:[#allocation5 + $0x20] sm:$0xff]
    %v93 = vld [vmem:[#allocation5 + $0x28] sm:$0xff]
    %v94 = vld [vmem:[#allocation5 + $0x30] sm:$0xff]
    %v95 = vld [vmem:[#allocation5 + $0x38] sm:$0xff]
    %v96 = vld [vmem:[#allocation5 + $0x40] sm:$0xff]
    %v97 = vld [vmem:[#allocation5 + $0x48] sm:$0xff]
    %v98 = vld [vmem:[#allocation5 + $0x50] sm:$0xff]
    %v99 = vld [vmem:[#allocation5 + $0x58] sm:$0xff]
    %v100 = vld [vmem:[#allocation5 + $0x60] sm:$0xff]
    %v101 = vld [vmem:[#allocation5 + $0x68] sm:$0xff]
    %v102 = vld [vmem:[#allocation5 + $0x70] sm:$0xff]
    %v103 = vld [vmem:[#allocation5 + $0x78] sm:$0xff]
    %v104 = vld [vmem:[#allocation5 + $0x80] sm:$0xff]
    %v105 = vld [vmem:[#allocation5 + $0x88] sm:$0xff]
    %v106 = vld [vmem:[#allocation5 + $0x90] sm:$0xff]
    %v107 = vld [vmem:[#allocation5 + $0x98] sm:$0xff]
    %v108 = vld [vmem:[#allocation5 + $0xa0] sm:$0xff]
    %v109 = vld [vmem:[#allocation5 + $0xa8] sm:$0xff]
    %v110 = vld [vmem:[#allocation5 + $0xb0] sm:$0xff]
    %v111 = vld [vmem:[#allocation5 + $0xb8] sm:$0xff]
    %v112 = vld [vmem:[#allocation5 + $0xc0] sm:$0xff]
    %v113 = vld [vmem:[#allocation5 + $0xc8] sm:$0xff]
    %v114 = vld [vmem:[#allocation5 + $0xd0] sm:$0xff]
    %v115 = vld [vmem:[#allocation5 + $0xd8] sm:$0xff]
    %v116 = vld [vmem:[#allocation5 + $0xe0] sm:$0xff]
    %v117 = vld [vmem:[#allocation5 + $0xe8] sm:$0xff]
    %v118 = vld [vmem:[#allocation5 + $0xf0] sm:$0xff]
    %v119 = vld [vmem:[#allocation5 + $0xf8] sm:$0xff]
    %v152 = vunpack.c.l.b16 %v88
    %v153 = vunpack.c.h.b16 %v88
    %v154 = vunpack.c.l.b16 %v89
    %v155 = vunpack.c.h.b16 %v89
    %v156 = vunpack.c.l.b16 %v90
    %v157 = vunpack.c.h.b16 %v90
    %v158 = vunpack.c.l.b16 %v91
    %v159 = vunpack.c.h.b16 %v91
    %v160 = vunpack.c.l.b16 %v92
    %v161 = vunpack.c.h.b16 %v92
    %v162 = vunpack.c.l.b16 %v93
    %v163 = vunpack.c.h.b16 %v93
    %v164 = vunpack.c.l.b16 %v94
    %v165 = vunpack.c.h.b16 %v94
    %v166 = vunpack.c.l.b16 %v95
    %v167 = vunpack.c.h.b16 %v95
    %v168 = vunpack.c.l.b16 %v96
    %v169 = vunpack.c.h.b16 %v96
    %v170 = vunpack.c.l.b16 %v97
    %v171 = vunpack.c.h.b16 %v97
    %v172 = vunpack.c.l.b16 %v98
    %v173 = vunpack.c.h.b16 %v98
    %v174 = vunpack.c.l.b16 %v99
    %v175 = vunpack.c.h.b16 %v99
    %v176 = vunpack.c.l.b16 %v100
    %v177 = vunpack.c.h.b16 %v100
    %v178 = vunpack.c.l.b16 %v101
    %v179 = vunpack.c.h.b16 %v101
    %v180 = vunpack.c.l.b16 %v102
    %v181 = vunpack.c.h.b16 %v102
    %v182 = vunpack.c.l.b16 %v103
    %v183 = vunpack.c.h.b16 %v103
    %v184 = vunpack.c.l.b16 %v104
    %v185 = vunpack.c.h.b16 %v104
    %v186 = vunpack.c.l.b16 %v105
    %v187 = vunpack.c.h.b16 %v105
    %v188 = vunpack.c.l.b16 %v106
    %v189 = vunpack.c.h.b16 %v106
    %v190 = vunpack.c.l.b16 %v107
    %v191 = vunpack.c.h.b16 %v107
    %v192 = vunpack.c.l.b16 %v108
    %v193 = vunpack.c.h.b16 %v108
    %v194 = vunpack.c.l.b16 %v109
    %v195 = vunpack.c.h.b16 %v109
    %v196 = vunpack.c.l.b16 %v110
    %v197 = vunpack.c.h.b16 %v110
    %v198 = vunpack.c.l.b16 %v111
    %v199 = vunpack.c.h.b16 %v111
    %v200 = vunpack.c.l.b16 %v112
    %v201 = vunpack.c.h.b16 %v112
    %v202 = vunpack.c.l.b16 %v113
    %v203 = vunpack.c.h.b16 %v113
    %v204 = vunpack.c.l.b16 %v114
    %v205 = vunpack.c.h.b16 %v114
    %v206 = vunpack.c.l.b16 %v115
    %v207 = vunpack.c.h.b16 %v115
    %v208 = vunpack.c.l.b16 %v116
    %v209 = vunpack.c.h.b16 %v116
    %v210 = vunpack.c.l.b16 %v117
    %v211 = vunpack.c.h.b16 %v117
    %v212 = vunpack.c.l.b16 %v118
    %v213 = vunpack.c.h.b16 %v118
    %v214 = vunpack.c.l.b16 %v119
    %v215 = vunpack.c.h.b16 %v119
    %v216 = vpack.c.b16 %v154, %v152
    %v217 = vpack.c.b16 %v155, %v153
    %v218 = vpack.c.b16 %v158, %v156
    %v219 = vpack.c.b16 %v159, %v157
    %v220 = vpack.c.b16 %v162, %v160
    %v221 = vpack.c.b16 %v163, %v161
    %v222 = vpack.c.b16 %v166, %v164
    %v223 = vpack.c.b16 %v167, %v165
    %v224 = vpack.c.b16 %v170, %v168
    %v225 = vpack.c.b16 %v171, %v169
    %v226 = vpack.c.b16 %v174, %v172
    %v227 = vpack.c.b16 %v175, %v173
    %v228 = vpack.c.b16 %v178, %v176
    %v229 = vpack.c.b16 %v179, %v177
    %v230 = vpack.c.b16 %v182, %v180
    %v231 = vpack.c.b16 %v183, %v181
    %v232 = vpack.c.b16 %v186, %v184
    %v233 = vpack.c.b16 %v187, %v185
    %v234 = vpack.c.b16 %v190, %v188
    %v235 = vpack.c.b16 %v191, %v189
    %v236 = vpack.c.b16 %v194, %v192
    %v237 = vpack.c.b16 %v195, %v193
    %v238 = vpack.c.b16 %v198, %v196
    %v239 = vpack.c.b16 %v199, %v197
    %v240 = vpack.c.b16 %v202, %v200
    %v241 = vpack.c.b16 %v203, %v201
    %v242 = vpack.c.b16 %v206, %v204
    %v243 = vpack.c.b16 %v207, %v205
    %v244 = vpack.c.b16 %v210, %v208
    %v245 = vpack.c.b16 %v211, %v209
    %v246 = vpack.c.b16 %v214, %v212
    %v247 = vpack.c.b16 %v215, %v213
    %280 = vmatprep.subr.bf16.mxu0 %v231
    %281 = vmatpush1.bf16.msra.mxu0 %v230
    %282 = vmatprep.subr.bf16.mxu0 %v229
    %283 = vmatpush1.bf16.msra.mxu0 %v228
    %284 = vmatprep.subr.bf16.mxu0 %v227
    %285 = vmatpush1.bf16.msra.mxu0 %v226
    %286 = vmatprep.subr.bf16.mxu0 %v225
    %287 = vmatpush1.bf16.msra.mxu0 %v224
    %288 = vmatprep.subr.bf16.mxu0 %v223
    %289 = vmatpush1.bf16.msra.mxu0 %v222
    %290 = vmatprep.subr.bf16.mxu0 %v221
    %291 = vmatpush1.bf16.msra.mxu0 %v220
    %292 = vmatprep.subr.bf16.mxu0 %v219
    %293 = vmatpush1.bf16.msra.mxu0 %v218
    %294 = vmatprep.subr.bf16.mxu0 %v217
    %295 = vmatpush1.bf16.msra.mxu0 %v216
    %296 = vmatprep.subr.bf16.mxu0 %v247
    %297 = vmatpush2.bf16.msra.mxu0 %v246
    %298 = vmatprep.subr.bf16.mxu0 %v245
    %299 = vmatpush2.bf16.msra.mxu0 %v244
    %300 = vmatprep.subr.bf16.mxu0 %v243
    %301 = vmatpush2.bf16.msra.mxu0 %v242
    %302 = vmatprep.subr.bf16.mxu0 %v241
    %303 = vmatpush2.bf16.msra.mxu0 %v240
    %304 = vmatprep.subr.bf16.mxu0 %v239
    %305 = vmatpush2.bf16.msra.mxu0 %v238
    %306 = vmatprep.subr.bf16.mxu0 %v237
    %307 = vmatpush2.bf16.msra.mxu0 %v236
    %308 = vmatprep.subr.bf16.mxu0 %v235
    %309 = vmatpush2.bf16.msra.mxu0 %v234
    %310 = vmatprep.subr.bf16.mxu0 %v233
    %311 = vmatpush2.bf16.msra.mxu0 %v232
    %312 = vmatprep.mubr.bf16.mxu0 %v87
    %313 = vmatmul.mubr.bf16.gmra.mxu0 %v86
    %v314 = vpop.f32.mrf.mxu0
    %v315 = vadd.f32 0.0, %v314
    %v316 = vpop.f32.mrf.mxu0
    %v317 = vadd.f32 0.0, %v316
    %v318 = vpop.f32.mrf.mxu0
    %v319 = vpop.f32.mrf.mxu0
    %320 = vdwg.mxu0
    %v321 = vpack.c.bf16 %v315, %v315
    %v322 = vpack.c.bf16 %v317, %v317
    %v323 = vld [vmem:[#allocation7] sm:$0xf]
    %v324 = vld [vmem:[#allocation8] sm:$0xff]
    %v325 = vld [vmem:[#allocation8 + $0x8] sm:$0xff]
    %vm326 = vcmask 64512
    %v328 = vsel %vm326, %v323, 0
    %vm330 = vcmask 1043456
    %v332 = vsel %vm330, %v321, 0
    %v335 = vsel %vm330, %v322, 0
    %337 = vmatprep.subr.bf16.mxu0 0
    %338 = vmatpush1.bf16.msra.mxu0 0
    %339 = vmatprep.subr.bf16.mxu0 0
    %340 = vmatpush1.bf16.msra.mxu0 0
    %341 = vmatprep.subr.bf16.mxu0 0
    %342 = vmatpush1.bf16.msra.mxu0 0
    %343 = vmatprep.subr.bf16.mxu0 0
    %344 = vmatpush1.bf16.msra.mxu0 0
    %345 = vmatprep.subr.bf16.mxu0 0
    %346 = vmatpush1.bf16.msra.mxu0 0
    %347 = vmatprep.subr.bf16.mxu0 0
    %348 = vmatpush1.bf16.msra.mxu0 0
    %349 = vmatprep.subr.bf16.mxu0 0
    %350 = vmatpush1.bf16.msra.mxu0 0
    %351 = vmatprep.subr.bf16.mxu0 %v335
    %352 = vmatpush1.bf16.msra.mxu0 %v332
    %353 = vmatprep.subr.bf16.mxu0 0
    %354 = vmatpush2.bf16.msra.mxu0 0
    %355 = vmatprep.subr.bf16.mxu0 0
    %356 = vmatpush2.bf16.msra.mxu0 0
    %357 = vmatprep.subr.bf16.mxu0 0
    %358 = vmatpush2.bf16.msra.mxu0 0
    %359 = vmatprep.subr.bf16.mxu0 0
    %360 = vmatpush2.bf16.msra.mxu0 0
    %361 = vmatprep.subr.bf16.mxu0 0
    %362 = vmatpush2.bf16.msra.mxu0 0
    %363 = vmatprep.subr.bf16.mxu0 0
    %364 = vmatpush2.bf16.msra.mxu0 0
    %365 = vmatprep.subr.bf16.mxu0 0
    %366 = vmatpush2.bf16.msra.mxu0 0
    %367 = vmatprep.subr.bf16.mxu0 0
    %368 = vmatpush2.bf16.msra.mxu0 0
    %369 = vmatprep.mubr.bf16.mxu0 0
    %370 = vmatmul.mubr.bf16.gmra.mxu0 %v328
    %v371 = vpop.f32.mrf.mxu0
    %v372 = vadd.f32 %v324, %v371
    %v373 = vpop.f32.mrf.mxu0
    %v374 = vadd.f32 %v325, %v373
    %v375 = vpop.f32.mrf.mxu0
    %v376 = vpop.f32.mrf.mxu0
    %377 = vdwg.mxu0
    %v378 = vmul.f32 %v372, 0.5
    %v379 = vmul.f32 %v374, 0.5
    %v380 = vmul.f32 %v372, 0.044715
    %v381 = vmul.f32 %v374, 0.044715
    %v382 = vmul.f32 %v380, %v372
    %v383 = vmul.f32 %v381, %v374
    %v384 = vmul.f32 %v382, %v372
    %v385 = vmul.f32 %v383, %v374
    %v386 = vadd.f32 %v372, %v384
    %v387 = vadd.f32 %v374, %v385
    %v388 = vmul.f32 %v386, 0.7978846
    %v389 = vmul.f32 %v387, 0.7978846
    %v390 = vtanh.pop %v388
    %v391 = vtanh.pop %v389
    %v392 = vadd.f32 %v390, 1.0
    %v393 = vadd.f32 %v391, 1.0
    %v394 = vmul.f32 %v378, %v392
    %v395 = vmul.f32 %v379, %v393
    %s396 = scalar_lea.vmem [#allocation10], 144
    %v397 = vld [vmem:[%s396] sm:$0xff]
    %v398 = vld [vmem:[%s396 + $0x8] sm:$0xff]
    %v399 = vadd.f32 %v84, %v397
    %v400 = vadd.f32 %v85, %v398
    %401 = vrot.lane.b32.xlu0 %v394, 17
    %v402 = vpop.permute.xlu0 %401
    %403 = vrot.lane.b32.xlu0 %v395, 17
    %v404 = vpop.permute.xlu0 %403
    %v405 = vlaneseq
    %v406 = vand.u32 %v405, 127
    %vm407 = vcmp.lt.s32.totalorder %v406, 17
    %v408 = vsel %vm407, %v402, %v404
    %v409 = vsel %vm407, %v404, %v402
    %v410 = vld [vmem:[#allocation10] sm:$0xff]
    %v411 = vld [vmem:[#allocation10 + $0x8] sm:$0xff]
    %v412 = vmul.f32 %v410, %v409
    %v413 = vmul.f32 %v411, %v408
    %v414 = vadd.f32 %v399, %v412
    %v415 = vadd.f32 %v400, %v413
    %416 = vrot.lane.b32.xlu0 %v394, 16
    %v417 = vpop.permute.xlu0 %416
    %418 = vrot.lane.b32.xlu0 %v395, 16
    %v419 = vpop.permute.xlu0 %418
    %vm420 = vcmp.lt.s32.totalorder %v406, 16
    %v421 = vsel %vm420, %v417, %v419
    %v422 = vsel %vm420, %v419, %v417
    %s423 = scalar_lea.vmem [#allocation10], 16
    %v424 = vld [vmem:[%s423] sm:$0xff]
    %v425 = vld [vmem:[%s423 + $0x8] sm:$0xff]
    %v426 = vmul.f32 %v424, %v422
    %v427 = vmul.f32 %v425, %v421
    %v428 = vadd.f32 %v414, %v426
    %v429 = vadd.f32 %v415, %v427
    %430 = vrot.lane.b32.xlu0 %v394, 15
    %v431 = vpop.permute.xlu0 %430
    %432 = vrot.lane.b32.xlu0 %v395, 15
    %v433 = vpop.permute.xlu0 %432
    %vm434 = vcmp.lt.s32.totalorder %v406, 15
    %v435 = vsel %vm434, %v431, %v433
    %v436 = vsel %vm434, %v433, %v431
    %s437 = scalar_lea.vmem [#allocation10], 32
    %v438 = vld [vmem:[%s437] sm:$0xff]
    %v439 = vld [vmem:[%s437 + $0x8] sm:$0xff]
    %v440 = vmul.f32 %v438, %v436
    %v441 = vmul.f32 %v439, %v435
    %v442 = vadd.f32 %v428, %v440
    %v443 = vadd.f32 %v429, %v441
    %444 = vrot.lane.b32.xlu0 %v394, 1
    %v445 = vpop.permute.xlu0 %444
    %446 = vrot.lane.b32.xlu0 %v395, 1
    %v447 = vpop.permute.xlu0 %446
    %vm448 = vcmp.lt.s32.totalorder %v406, 1
    %v449 = vsel %vm448, %v445, %v447
    %v450 = vsel %vm448, %v447, %v445
    %s451 = scalar_lea.vmem [#allocation10], 48
    %v452 = vld [vmem:[%s451] sm:$0xff]
    %v453 = vld [vmem:[%s451 + $0x8] sm:$0xff]
    %v454 = vmul.f32 %v452, %v450
    %v455 = vmul.f32 %v453, %v449
    %v456 = vadd.f32 %v442, %v454
    %v457 = vadd.f32 %v443, %v455
    %s458 = scalar_lea.vmem [#allocation10], 64
    %v459 = vld [vmem:[%s458] sm:$0xff]
    %v460 = vld [vmem:[%s458 + $0x8] sm:$0xff]
    %v461 = vmul.f32 %v459, %v394
    %v462 = vmul.f32 %v460, %v395
    %v463 = vadd.f32 %v456, %v461
    %v464 = vadd.f32 %v457, %v462
    %465 = vrot.lane.b32.xlu0 %v394, 127
    %v466 = vpop.permute.xlu0 %465
    %467 = vrot.lane.b32.xlu0 %v395, 127
    %v468 = vpop.permute.xlu0 %467
    %vm469 = vcmp.lt.s32.totalorder %v406, 127
    %v470 = vsel %vm469, %v466, %v468
    %v471 = vsel %vm469, %v468, %v466
    %s472 = scalar_lea.vmem [#allocation10], 80
    %v473 = vld [vmem:[%s472] sm:$0xff]
    %v474 = vld [vmem:[%s472 + $0x8] sm:$0xff]
    %v475 = vmul.f32 %v473, %v470
    %v476 = vmul.f32 %v474, %v471
    %v477 = vadd.f32 %v463, %v475
    %v478 = vadd.f32 %v464, %v476
    %479 = vrot.lane.b32.xlu0 %v394, 113
    %v480 = vpop.permute.xlu0 %479
    %481 = vrot.lane.b32.xlu0 %v395, 113
    %v482 = vpop.permute.xlu0 %481
    %vm483 = vcmp.lt.s32.totalorder %v406, 113
    %v484 = vsel %vm483, %v480, %v482
    %v485 = vsel %vm483, %v482, %v480
    %s486 = scalar_lea.vmem [#allocation10], 96
    %v487 = vld [vmem:[%s486] sm:$0xff]
    %v488 = vld [vmem:[%s486 + $0x8] sm:$0xff]
    %v489 = vmul.f32 %v487, %v484
    %v490 = vmul.f32 %v488, %v485
    %v491 = vadd.f32 %v477, %v489
    %v492 = vadd.f32 %v478, %v490
    %493 = vrot.lane.b32.xlu0 %v394, 112
    %v494 = vpop.permute.xlu0 %493
    %495 = vrot.lane.b32.xlu0 %v395, 112
    %v496 = vpop.permute.xlu0 %495
    %vm497 = vcmp.lt.s32.totalorder %v406, 112
    %v498 = vsel %vm497, %v494, %v496
    %v499 = vsel %vm497, %v496, %v494
    %s500 = scalar_lea.vmem [#allocation10], 112
    %v501 = vld [vmem:[%s500] sm:$0xff]
    %v502 = vld [vmem:[%s500 + $0x8] sm:$0xff]
    %v503 = vmul.f32 %v501, %v498
    %v504 = vmul.f32 %v502, %v499
    %v505 = vadd.f32 %v491, %v503
    %v506 = vadd.f32 %v492, %v504
    %507 = vrot.lane.b32.xlu0 %v394, 111
    %v508 = vpop.permute.xlu0 %507
    %509 = vrot.lane.b32.xlu0 %v395, 111
    %v510 = vpop.permute.xlu0 %509
    %vm511 = vcmp.lt.s32.totalorder %v406, 111
    %v512 = vsel %vm511, %v508, %v510
    %v513 = vsel %vm511, %v510, %v508
    %s514 = scalar_lea.vmem [#allocation10], 128
    %v515 = vld [vmem:[%s514] sm:$0xff]
    %v516 = vld [vmem:[%s514 + $0x8] sm:$0xff]
    %v517 = vmul.f32 %v515, %v512
    %v518 = vmul.f32 %v516, %v513
    %v519 = vadd.f32 %v505, %v517
    %v520 = vadd.f32 %v506, %v518
    %v521 = vmul.f32 %v519, 0.5
    %v522 = vmul.f32 %v520, 0.5
    %v523 = vmul.f32 %v519, 0.044715
    %v524 = vmul.f32 %v520, 0.044715
    %v525 = vmul.f32 %v523, %v519
    %v526 = vmul.f32 %v524, %v520
    %v527 = vmul.f32 %v525, %v519
    %v528 = vmul.f32 %v526, %v520
    %v529 = vadd.f32 %v519, %v527
    %v530 = vadd.f32 %v520, %v528
    %v531 = vmul.f32 %v529, 0.7978846
    %v532 = vmul.f32 %v530, 0.7978846
    %v533 = vtanh.pop %v531
    %v534 = vtanh.pop %v532
    %v535 = vadd.f32 %v533, 1.0
    %v536 = vadd.f32 %v534, 1.0
    %v537 = vmul.f32 %v521, %v535
    %v538 = vmul.f32 %v522, %v536
    %539 = vst [vmem:[#allocation11] sm:$0xff] %v537
    %540 = vst [vmem:[#allocation11 + $0x8] sm:$0xff] %v538
    // Predicated region
    $region42: #{tpu_custom_call.1} parent=1 // pred_check
      _
    $region43: #{tpu_custom_call.1} parent=1 // pred_check_branch
      %542 = sbr.rel (0) target = $region45
    $region44: #{tpu_custom_call.1} parent=1 // pred_region
      %s544 = ssub.s32 256, 256
      %545 = vsyncadd [#allocation4], %s544
      %s547 = sshll.u32 [#allocation11], 4
      %s548 = int_to_ptr.vmem [resolvable:$true] %s547
      %550 = dma.vmem_to_hbm [thread:$0]  %s548, 256, %s5, [#allocation4]
    $region45: #{tpu_custom_call.1} parent=1 // pred_fallthru
      _
    // Predicated region
    $region46: #{tpu_custom_call.1} parent=1 // pred_check
      _
    $region47: #{tpu_custom_call.1} parent=1 // pred_check_branch
      %552 = sbr.rel (0) target = $region49
    $region48: #{tpu_custom_call.1} parent=1 // pred_region
      %553 = dma.done [#allocation4], 256
    $region49: #{tpu_custom_call.1} parent=1 // pred_fallthru
      _
    %554 = vsyncpa [#allocation3], 1
    %555 = vsyncpa [#allocation6], 1
    %556 = vsyncpa [#allocation9], 1
    %557 = vsyncpa [#allocation4], 1

</llo_original>
